<compile_context>
chip_gen: v7x
topology: tpu7x:2x2x1
jax: 0.10.0
libtpu: 0.0.40
codegen_flags: <defaults>
</compile_context>

<pallas_src>
import functools
import math

import numpy as np
import jax
import jax.numpy as jnp
from jax import lax
from jax.experimental import pallas as pl
from jax.experimental.pallas import tpu as pltpu

_COS_EPS_SQ = 1e-16   # clamp on squared row norm (matches torch eps=1e-8 on norm)
_NEG_BIG = -1e30      # "minus infinity" for masked logits (safe under exp)


# ---------------------------------------------------------------------------
# Fused kernel: entropy regularizer + cosine-sim contrastive cross-entropy
#   c_ref : (N, B) float32, N = 2*class_num, rows = cluster vectors over batch
#   out   : (1, 1) float32 scalar loss
# ---------------------------------------------------------------------------
def _cluster_loss_kernel(c_ref, out_ref, *, class_num, temperature):
    c = c_ref[...].astype(jnp.float32)                    # (N, B)
    n, _ = c.shape
    k = class_num

    # ---- entropy regularizer (ne_i + ne_j) -------------------------------
    rowsum = jnp.sum(c, axis=1, keepdims=True)            # (N, 1): col-sums of c_i/c_j
    ridx = lax.broadcasted_iota(jnp.int32, (n, 1), 0)
    is_i = ridx < k                                        # first K rows <- view i
    sum_i = jnp.sum(jnp.where(is_i, rowsum, 0.0), axis=0, keepdims=True)   # (1,1)
    sum_j = jnp.sum(jnp.where(is_i, 0.0, rowsum), axis=0, keepdims=True)   # (1,1)
    p_i = rowsum / sum_i
    p_j = rowsum / sum_j
    ent_i = jnp.sum(jnp.where(is_i, p_i * jnp.log(p_i), 0.0), axis=0, keepdims=True)
    ent_j = jnp.sum(jnp.where(is_i, 0.0, p_j * jnp.log(p_j)), axis=0, keepdims=True)
    ne_loss = 2.0 * math.log(k) + ent_i + ent_j            # (1, 1)

    # ---- cosine-similarity logits ----------------------------------------
    sumsq = jnp.sum(c * c, axis=1, keepdims=True)          # (N, 1)
    inv_norm = lax.rsqrt(jnp.maximum(sumsq, _COS_EPS_SQ))  # EUP rsqrt
    cn = c * inv_norm                                      # row-normalized (N, B)
    # sim[a, b] = <cn[a], cn[b]>  -- dot(A, A^T) on the MXU, contract lane dim
    sim = lax.dot_general(cn, cn, (((1,), (1,)), ((), ())),
                          preferred_element_type=jnp.float32)   # (N, N)
    sim = sim * jnp.float32(1.0 / temperature)

    ii = lax.broadcasted_iota(jnp.int32, (n, n), 0)
    jj = lax.broadcasted_iota(jnp.int32, (n, n), 1)
    diag = ii == jj
    pmask = jnp.abs(ii - jj) == k                          # positive-pair partner

    # cross entropy with label 0 == logsumexp over all off-diagonal entries
    # of the row minus the positive entry
    sm = jnp.where(diag, jnp.float32(_NEG_BIG), sim)
    row_max = jnp.max(sm, axis=1, keepdims=True)           # (N, 1)
    sumexp = jnp.sum(jnp.exp(sm - row_max), axis=1, keepdims=True)
    lse = row_max + jnp.log(sumexp)                        # (N, 1)
    pos = jnp.sum(jnp.where(pmask, sim, 0.0), axis=1, keepdims=True)  # (N, 1)

    ce_sum = jnp.sum(lse - pos, axis=0, keepdims=True)     # (1, 1), reduction='sum'
    out_ref[...] = ce_sum * jnp.float32(1.0 / n) + ne_loss


# ---------------------------------------------------------------------------
# Wrapper: full ClusterLoss.forward
# ---------------------------------------------------------------------------
@functools.partial(jax.jit, static_argnames=("class_num", "temperature"))
def cluster_loss(c_i, c_j, *, class_num, temperature=1.0):
    # layout glue only: rows = cluster vectors, batch on the lane axis
    c = jnp.concatenate([c_i.T, c_j.T], axis=0).astype(jnp.float32)   # (2K, B)
    kern = functools.partial(_cluster_loss_kernel,
                             class_num=int(class_num),
                             temperature=float(temperature))
    out = pl.pallas_call(
        kern,
        out_shape=jax.ShapeDtypeStruct((1, 1), jnp.float32),
        in_specs=[pl.BlockSpec(memory_space=pltpu.MemorySpace.VMEM)],
        out_specs=pl.BlockSpec(memory_space=pltpu.MemorySpace.VMEM),
    )(c)
    return out[0, 0]


# ---------------------------------------------------------------------------
# Independent NumPy reference (mirrors the PyTorch module literally)
# ---------------------------------------------------------------------------
def _reference_numpy(c_i, c_j, class_num, temperature=1.0):
    c_i = np.asarray(c_i, np.float64)
    c_j = np.asarray(c_j, np.float64)
    k = class_num
    n = 2 * k
    p_i = c_i.sum(0); p_i = p_i / p_i.sum()
    ne_i = math.log(k) + (p_i * np.log(p_i)).sum()
    p_j = c_j.sum(0); p_j = p_j / p_j.sum()
    ne_j = math.log(k) + (p_j * np.log(p_j)).sum()
    c = np.concatenate([c_i.T, c_j.T], axis=0)
    nrm = np.linalg.norm(c, axis=1)
    sim = (c @ c.T) / np.maximum(np.outer(nrm, nrm), 1e-8) / temperature
    pos = np.concatenate([np.diag(sim, k), np.diag(sim, -k)])
    mask = np.ones((n, n), bool)
    np.fill_diagonal(mask, False)
    for i in range(k):
        mask[i, k + i] = False
        mask[k + i, i] = False
    neg = sim[mask].reshape(n, -1)
    logits = np.concatenate([pos[:, None], neg], axis=1)
    m = logits.max(axis=1, keepdims=True)
    lse = m[:, 0] + np.log(np.exp(logits - m).sum(axis=1))
    loss = np.sum(lse - logits[:, 0]) / n
    return loss + ne_i + ne_j


if __name__ == "__main__":
    key = jax.random.PRNGKey(0)
    k1, k2 = jax.random.split(key)

    B, K = 128, 10                      # batch=128, class_num=10
    temperature = 1.0
    # soft cluster-assignment probabilities (what the module consumes)
    c_i = jax.nn.softmax(jax.random.normal(k1, (B, K), jnp.float32), axis=1)
    c_j = jax.nn.softmax(jax.random.normal(k2, (B, K), jnp.float32), axis=1)

    loss = cluster_loss(c_i, c_j, class_num=K, temperature=temperature)
    loss = jax.block_until_ready(loss)

    ref = _reference_numpy(np.asarray(c_i), np.asarray(c_j), K, temperature)
    assert loss.shape == () and bool(jnp.isfinite(loss))
    assert abs(float(loss) - float(ref)) < 1e-3 * max(1.0, abs(float(ref))), (
        float(loss), float(ref))
    print("KERNEL_OK")
</pallas_src>

<mosaic_0001>
module attributes {stable_mosaic.version = 11 : i64} {
  func.func @_cluster_loss_kernel(%arg0: memref<20x128xf32, #tpu.memory_space<vmem>>, %arg1: memref<1x1xf32, #tpu.memory_space<vmem>>) attributes {dimension_semantics = [], scalar_prefetch = 0 : i64, scratch_operands = 0 : i64, tpu.core_type = #tpu.core_type<tc>} {
    %c0 = arith.constant 0 : index
    %c0_0 = arith.constant 0 : index
    %0 = vector.load %arg0[%c0, %c0_0] : memref<20x128xf32, #tpu.memory_space<vmem>>, vector<20x128xf32>
    %cst = arith.constant dense<0.000000e+00> : vector<20xf32>
    %1 = vector.multi_reduction <add>, %0, %cst [1] : vector<20x128xf32> to vector<20xf32>
    %2 = vector.shape_cast %1 : vector<20xf32> to vector<20x1xf32>
    %3 = tpu.iota {dimensions = array<i32: 0>} : vector<20x1xi32>
    %c10_i32 = arith.constant 10 : i32
    %4 = vector.broadcast %c10_i32 : i32 to vector<20x1xi32>
    %5 = arith.cmpi slt, %3, %4 : vector<20x1xi32>
    %cst_1 = arith.constant 0.000000e+00 : f32
    %6 = vector.broadcast %cst_1 : f32 to vector<20x1xf32>
    %7 = arith.select %5, %2, %6 : vector<20x1xi1>, vector<20x1xf32>
    %cst_2 = arith.constant dense<0.000000e+00> : vector<1xf32>
    %8 = vector.multi_reduction <add>, %7, %cst_2 [0] : vector<20x1xf32> to vector<1xf32>
    %9 = vector.shape_cast %8 : vector<1xf32> to vector<1x1xf32>
    %cst_3 = arith.constant 0.000000e+00 : f32
    %10 = vector.broadcast %cst_3 : f32 to vector<20x1xf32>
    %11 = arith.select %5, %10, %2 : vector<20x1xi1>, vector<20x1xf32>
    %cst_4 = arith.constant dense<0.000000e+00> : vector<1xf32>
    %12 = vector.multi_reduction <add>, %11, %cst_4 [0] : vector<20x1xf32> to vector<1xf32>
    %13 = vector.shape_cast %12 : vector<1xf32> to vector<1x1xf32>
    %14 = vector.broadcast %9 : vector<1x1xf32> to vector<20x1xf32>
    %15 = arith.divf %2, %14 : vector<20x1xf32>
    %16 = vector.broadcast %13 : vector<1x1xf32> to vector<20x1xf32>
    %17 = arith.divf %2, %16 : vector<20x1xf32>
    %18 = math.log %15 : vector<20x1xf32>
    %19 = arith.mulf %15, %18 : vector<20x1xf32>
    %cst_5 = arith.constant 0.000000e+00 : f32
    %20 = vector.broadcast %cst_5 : f32 to vector<20x1xf32>
    %21 = arith.select %5, %19, %20 : vector<20x1xi1>, vector<20x1xf32>
    %cst_6 = arith.constant dense<0.000000e+00> : vector<1xf32>
    %22 = vector.multi_reduction <add>, %21, %cst_6 [0] : vector<20x1xf32> to vector<1xf32>
    %23 = vector.shape_cast %22 : vector<1xf32> to vector<1x1xf32>
    %24 = math.log %17 : vector<20x1xf32>
    %25 = arith.mulf %17, %24 : vector<20x1xf32>
    %cst_7 = arith.constant 0.000000e+00 : f32
    %26 = vector.broadcast %cst_7 : f32 to vector<20x1xf32>
    %27 = arith.select %5, %26, %25 : vector<20x1xi1>, vector<20x1xf32>
    %cst_8 = arith.constant dense<0.000000e+00> : vector<1xf32>
    %28 = vector.multi_reduction <add>, %27, %cst_8 [0] : vector<20x1xf32> to vector<1xf32>
    %29 = vector.shape_cast %28 : vector<1xf32> to vector<1x1xf32>
    %cst_9 = arith.constant 4.60517025 : f32
    %30 = vector.broadcast %cst_9 : f32 to vector<1x1xf32>
    %31 = arith.addf %30, %23 : vector<1x1xf32>
    %32 = arith.addf %31, %29 : vector<1x1xf32>
    %33 = arith.mulf %0, %0 : vector<20x128xf32>
    %cst_10 = arith.constant dense<0.000000e+00> : vector<20xf32>
    %34 = vector.multi_reduction <add>, %33, %cst_10 [1] : vector<20x128xf32> to vector<20xf32>
    %35 = vector.shape_cast %34 : vector<20xf32> to vector<20x1xf32>
    %cst_11 = arith.constant 1.000000e-16 : f32
    %36 = vector.broadcast %cst_11 : f32 to vector<20x1xf32>
    %37 = arith.maximumf %35, %36 : vector<20x1xf32>
    %38 = math.rsqrt %37 : vector<20x1xf32>
    %39 = vector.broadcast %38 : vector<20x1xf32> to vector<20x128xf32>
    %40 = arith.mulf %0, %39 : vector<20x128xf32>
    %cst_12 = arith.constant dense<0.000000e+00> : vector<20x20xf32>
    %41 = tpu.matmul %40, %40, %cst_12 {dimension_numbers = #tpu.dot_dimension_numbers<[1], [1], [0], [0], [0, 0, 1, 0], [], []>} : vector<20x128xf32>, vector<20x128xf32>, vector<20x20xf32> -> vector<20x20xf32>
    %cst_13 = arith.constant 1.000000e+00 : f32
    %42 = vector.broadcast %cst_13 : f32 to vector<20x20xf32>
    %43 = arith.mulf %41, %42 : vector<20x20xf32>
    %44 = tpu.iota {dimensions = array<i32: 0>} : vector<20x20xi32>
    %45 = tpu.iota {dimensions = array<i32: 1>} : vector<20x20xi32>
    %46 = arith.cmpi eq, %44, %45 : vector<20x20xi32>
    %47 = arith.subi %44, %45 : vector<20x20xi32>
    %48 = math.absi %47 : vector<20x20xi32>
    %c10_i32_14 = arith.constant 10 : i32
    %49 = vector.broadcast %c10_i32_14 : i32 to vector<20x20xi32>
    %50 = arith.cmpi eq, %48, %49 : vector<20x20xi32>
    %cst_15 = arith.constant -1.000000e+30 : f32
    %51 = vector.broadcast %cst_15 : f32 to vector<20x20xf32>
    %52 = arith.select %46, %51, %43 : vector<20x20xi1>, vector<20x20xf32>
    %cst_16 = arith.constant dense<0xFF800000> : vector<20xf32>
    %53 = vector.multi_reduction <maximumf>, %52, %cst_16 [1] : vector<20x20xf32> to vector<20xf32>
    %54 = vector.shape_cast %53 : vector<20xf32> to vector<20x1xf32>
    %55 = vector.broadcast %54 : vector<20x1xf32> to vector<20x20xf32>
    %56 = arith.subf %52, %55 : vector<20x20xf32>
    %57 = math.exp %56 : vector<20x20xf32>
    %cst_17 = arith.constant dense<0.000000e+00> : vector<20xf32>
    %58 = vector.multi_reduction <add>, %57, %cst_17 [1] : vector<20x20xf32> to vector<20xf32>
    %59 = vector.shape_cast %58 : vector<20xf32> to vector<20x1xf32>
    %60 = math.log %59 : vector<20x1xf32>
    %61 = arith.addf %54, %60 : vector<20x1xf32>
    %cst_18 = arith.constant 0.000000e+00 : f32
    %62 = vector.broadcast %cst_18 : f32 to vector<20x20xf32>
    %63 = arith.select %50, %43, %62 : vector<20x20xi1>, vector<20x20xf32>
    %cst_19 = arith.constant dense<0.000000e+00> : vector<20xf32>
    %64 = vector.multi_reduction <add>, %63, %cst_19 [1] : vector<20x20xf32> to vector<20xf32>
    %65 = vector.shape_cast %64 : vector<20xf32> to vector<20x1xf32>
    %66 = arith.subf %61, %65 : vector<20x1xf32>
    %cst_20 = arith.constant dense<0.000000e+00> : vector<1xf32>
    %67 = vector.multi_reduction <add>, %66, %cst_20 [0] : vector<20x1xf32> to vector<1xf32>
    %68 = vector.shape_cast %67 : vector<1xf32> to vector<1x1xf32>
    %cst_21 = arith.constant 5.000000e-02 : f32
    %69 = vector.broadcast %cst_21 : f32 to vector<1x1xf32>
    %70 = arith.mulf %68, %69 : vector<1x1xf32>
    %71 = arith.addf %70, %32 : vector<1x1xf32>
    %c0_22 = arith.constant 0 : index
    %c0_23 = arith.constant 0 : index
    %72 = vector.load %arg1[%c0_22, %c0_23] : memref<1x1xf32, #tpu.memory_space<vmem>>, vector<1x1xf32>
    tpu.vector_store %arg1[%c0_22, %c0_23], %71 {strides = array<i32>} : memref<1x1xf32, #tpu.memory_space<vmem>>, vector<1x1xf32>,
    return
  }
}

</mosaic_0001>

<llo_original>
// kernel: cluster_loss.1
$region0: #{cluster_loss.1}
  #allocation0 [shape = 'u32[]', space=smem, size = 0x4, offset = 0x4, fixed_abs, tag = 'smem constant byte address 0x4 - core index']
  #allocation1 [shape = 'u32[144,128]{1,0:T(1,128)}', space=vmem, size = 0x12000, scoped, tag = 'internal scratch']
  %s0 = inlined_call_operand.vmem [shape: f32[20,128], index: 0, kind: input, shape index: {}]
  %s1 = inlined_call_operand.hbm [shape: f32[1,1], index: 1, kind: output, shape index: {}]
  %s2 = sld [smem:[#allocation0]]
  $region14: #{cluster_loss.1} parent=0
    _
  %s4 = ssub.s32 1, %s2
  %s5 = scalar_select 0, %s4, %s2
  $region1: #{cluster_loss.1} parent=0
    #allocation2 [shape = 'u8[512]{0}', space=vmem, size = 0x400, scoped, tag = 'output window, operand 0, single buffered']
    #allocation3 [shape = 's32[1]{0}', space=sflag, size = 0x4, scoped, tag = 'scoped memory for cluster_loss.1']
    %6 = vsyncpa [#allocation3], 0
    // Predicated region
    $region2: #{cluster_loss.1} parent=1 // pred_check
      _
    $region3: #{cluster_loss.1} parent=1 // pred_check_branch
      %8 = sbr.rel (0) target = $region5
    $region4: #{cluster_loss.1} parent=1 // pred_region
      _
    $region5: #{cluster_loss.1} parent=1 // pred_fallthru
      _
    %v9 = vld [vmem:[%s0] sm:$0xff]
    %v10 = vld [vmem:[%s0 + $0x8] sm:$0xff]
    %v11 = vld [vmem:[%s0 + $0x10] sm:$0xf]
    %12 = vadd.xlane.f32.xlu0 %v9
    %v13 = vpop.xlane.xlu0 %12
    %14 = vadd.xlane.f32.xlu0 %v10
    %v15 = vpop.xlane.xlu0 %14
    %vm16 = vcmask 1043456
    %v17 = vsel %vm16, %v11, 0.0
    %18 = vadd.xlane.f32.xlu0 %v17
    %v19 = vpop.xlane.xlu0 %18
    %v20 = vlaneseq
    %v21 = vshrl.u32 %v20, 7
    %v22 = vadd.s32 %v21, 8
    %v23 = vadd.s32 %v21, 16
    %vm24 = vcmp.lt.s32.totalorder %v21, 10
    %vm25 = vcmp.lt.s32.totalorder %v22, 10
    %vm26 = vcmp.lt.s32.totalorder %v23, 10
    %v27 = vsel %vm24, %v13, 0.0
    %v28 = vsel %vm25, %v15, 0.0
    %v29 = vsel %vm26, %v19, 0.0
    %v30 = vadd.f32 %v27, %v28
    %v31 = vsel %vm16, %v29, 0.0
    %v32 = vadd.f32 %v30, %v31
    %v33 = vrot.slane %v32, 4
    %v34 = vadd.f32 %v32, %v33
    %v35 = vrot.slane %v34, 2
    %v36 = vadd.f32 %v34, %v35
    %v37 = vrot.slane %v36, 1
    %v38 = vadd.f32 %v36, %v37
    %v39 = vsel %vm24, 0.0, %v13
    %v40 = vsel %vm25, 0.0, %v15
    %v41 = vsel %vm26, 0.0, %v19
    %v42 = vadd.f32 %v39, %v40
    %v43 = vsel %vm16, %v41, 0.0
    %v44 = vadd.f32 %v42, %v43
    %v45 = vrot.slane %v44, 4
    %v46 = vadd.f32 %v44, %v45
    %v47 = vrot.slane %v46, 2
    %v48 = vadd.f32 %v46, %v47
    %v49 = vrot.slane %v48, 1
    %v50 = vadd.f32 %v48, %v49
    %v51 = vrcp.pop %v38
    %v52 = vmul.f32 %v13, %v51
    %v53 = vmul.f32 %v15, %v51
    %v54 = vmul.f32 %v19, %v51
    %v55 = vrcp.pop %v50
    %v56 = vmul.f32 %v13, %v55
    %v57 = vmul.f32 %v15, %v55
    %v58 = vmul.f32 %v19, %v55
    %v59 = vlog2.pop %v52
    %v60 = vmul.f32 %v59, 0.6931472
    %v61 = vlog2.pop %v53
    %v62 = vmul.f32 %v61, 0.6931472
    %v63 = vlog2.pop %v54
    %v64 = vmul.f32 %v63, 0.6931472
    %v65 = vmul.f32 %v52, %v60
    %v66 = vmul.f32 %v53, %v62
    %v67 = vmul.f32 %v54, %v64
    %v68 = vsel %vm24, %v65, 0.0
    %v69 = vsel %vm25, %v66, 0.0
    %v70 = vsel %vm26, %v67, 0.0
    %v71 = vadd.f32 %v68, %v69
    %v72 = vsel %vm16, %v70, 0.0
    %v73 = vadd.f32 %v71, %v72
    %v74 = vrot.slane %v73, 4
    %v75 = vadd.f32 %v73, %v74
    %v76 = vrot.slane %v75, 2
    %v77 = vadd.f32 %v75, %v76
    %v78 = vrot.slane %v77, 1
    %v79 = vadd.f32 %v77, %v78
    %v80 = vlog2.pop %v56
    %v81 = vmul.f32 %v80, 0.6931472
    %v82 = vlog2.pop %v57
    %v83 = vmul.f32 %v82, 0.6931472
    %v84 = vlog2.pop %v58
    %v85 = vmul.f32 %v84, 0.6931472
    %v86 = vmul.f32 %v56, %v81
    %v87 = vmul.f32 %v57, %v83
    %v88 = vmul.f32 %v58, %v85
    %v89 = vsel %vm24, 0.0, %v86
    %v90 = vsel %vm25, 0.0, %v87
    %v91 = vsel %vm26, 0.0, %v88
    %v92 = vadd.f32 %v89, %v90
    %v93 = vsel %vm16, %v91, 0.0
    %v94 = vadd.f32 %v92, %v93
    %v95 = vrot.slane %v94, 4
    %v96 = vadd.f32 %v94, %v95
    %v97 = vrot.slane %v96, 2
    %v98 = vadd.f32 %v96, %v97
    %v99 = vrot.slane %v98, 1
    %v100 = vadd.f32 %v98, %v99
    %v101 = vadd.f32 %v79, 4.6051702
    %v102 = vadd.f32 %v101, %v100
    %v103 = vmul.f32 %v9, %v9
    %v104 = vmul.f32 %v10, %v10
    %v105 = vmul.f32 %v11, %v11
    %106 = vadd.xlane.f32.xlu0 %v103
    %v107 = vpop.xlane.xlu0 %106
    %108 = vadd.xlane.f32.xlu0 %v104
    %v109 = vpop.xlane.xlu0 %108
    %v110 = vsel %vm16, %v105, 0.0
    %111 = vadd.xlane.f32.xlu0 %v110
    %v112 = vpop.xlane.xlu0 %111
    %v113 = vmax.f32 %v107, 1e-16
    %v114 = vmax.f32 %v109, 1e-16
    %v115 = vmax.f32 %v112, 1e-16
    %v116 = vrsqrt.pop %v113
    %v117 = vrsqrt.pop %v114
    %v118 = vrsqrt.pop %v115
    %v119 = vmul.f32 %v9, %v116
    %v120 = vmul.f32 %v10, %v117
    %v121 = vmul.f32 %v11, %v118
    %122 = vmatprep.subr.mxu0 0.0
    %123 = vmatpush1.xpose.msra.mxu0 %v119
    %124 = vmatprep.subr.mxu0 0.0
    %125 = vmatpush1.xpose.msra.mxu0 %v120
    %126 = vmatprep.subr.mxu0 0.0
    %127 = vmatpush1.xpose.msra.mxu0 %v121
    %128 = vmatprep.subr.mxu0 0.0
    %129 = vmatpush1.xpose.msra.mxu0 0.0
    %130 = vmatprep.subr.mxu0 0.0
    %131 = vmatpush1.xpose.msra.mxu0 0.0
    %132 = vmatprep.subr.mxu0 0.0
    %133 = vmatpush1.xpose.msra.mxu0 0.0
    %134 = vmatprep.subr.mxu0 0.0
    %135 = vmatpush1.xpose.msra.mxu0 0.0
    %136 = vmatprep.subr.mxu0 0.0
    %137 = vmatpush1.xpose.msra.mxu0 0.0
    %138 = vmatprep.subr.mxu0 0.0
    %139 = vmatpush1.xpose.msra.mxu0 0.0
    %140 = vmatprep.subr.mxu0 0.0
    %141 = vmatpush1.xpose.msra.mxu0 0.0
    %142 = vmatprep.subr.mxu0 0.0
    %143 = vmatpush1.xpose.msra.mxu0 0.0
    %144 = vmatprep.subr.mxu0 0.0
    %145 = vmatpush1.xpose.msra.mxu0 0.0
    %146 = vmatprep.subr.mxu0 0.0
    %147 = vmatpush1.xpose.msra.mxu0 0.0
    %148 = vmatprep.subr.mxu0 0.0
    %149 = vmatpush1.xpose.msra.mxu0 0.0
    %150 = vmatprep.subr.mxu0 0.0
    %151 = vmatpush1.xpose.msra.mxu0 0.0
    %152 = vmatprep.subr.mxu0 0.0
    %153 = vmatpush1.xpose.msra.mxu0 0.0
    %154 = vmatprep.subr.mxu0 0.0
    %155 = vmatpush1.xpose.msra.mxu0 0.0
    %156 = vmatprep.subr.mxu0 0.0
    %157 = vmatpush1.xpose.msra.mxu0 0.0
    %158 = vmatprep.subr.mxu0 0.0
    %159 = vmatpush1.xpose.msra.mxu0 0.0
    %160 = vmatprep.subr.mxu0 0.0
    %161 = vmatpush1.xpose.msra.mxu0 0.0
    %162 = vmatprep.subr.mxu0 0.0
    %163 = vmatpush1.xpose.msra.mxu0 0.0
    %164 = vmatprep.subr.mxu0 0.0
    %165 = vmatpush1.xpose.msra.mxu0 0.0
    %166 = vmatprep.subr.mxu0 0.0
    %167 = vmatpush1.xpose.msra.mxu0 0.0
    %168 = vmatprep.subr.mxu0 0.0
    %169 = vmatpush1.xpose.msra.mxu0 0.0
    %170 = vmatprep.subr.mxu0 0.0
    %171 = vmatpush1.xpose.msra.mxu0 0.0
    %172 = vmatprep.subr.mxu0 0.0
    %173 = vmatpush1.xpose.msra.mxu0 0.0
    %174 = vmatprep.subr.mxu0 0.0
    %175 = vmatpush1.xpose.msra.mxu0 0.0
    %176 = vmatprep.subr.mxu0 0.0
    %177 = vmatpush1.xpose.msra.mxu0 0.0
    %178 = vmatprep.subr.mxu0 0.0
    %179 = vmatpush1.xpose.msra.mxu0 0.0
    %180 = vmatprep.subr.mxu0 0.0
    %181 = vmatpush1.xpose.msra.mxu0 0.0
    %182 = vmatprep.subr.mxu0 0.0
    %183 = vmatpush1.xpose.msra.mxu0 0.0
    %184 = vmatprep.subr.mxu0 0.0
    %185 = vmatpush1.xpose.msra.mxu0 0.0
    %186 = vmatprep.mubr.f32.mxu0 0.0
    %187 = vmatmul.mubr.f32.gmra.mrb[0].mxu0 %v119
    %v188 = vpop.f32.mrb[0].mxu0
    %v189 = vadd.f32 0.0, %v188
    %v190 = vpop.f32.mrb[0].mxu0
    %191 = vmatprep.mubr.f32.mxu0 0.0
    %192 = vmatmul.mubr.f32.gmra.mrb[0].mxu0 %v120
    %v193 = vpop.f32.mrb[0].mxu0
    %v194 = vadd.f32 0.0, %v193
    %v195 = vpop.f32.mrb[0].mxu0
    %196 = vmatprep.mubr.f32.mxu0 0.0
    %197 = vmatmul.mubr.f32.gmra.mrb[0].mxu0 %v121
    %v198 = vpop.f32.mrb[0].mxu0
    %v199 = vadd.f32 0.0, %v198
    %v200 = vpop.f32.mrb[0].mxu0
    %201 = vdwg.mxu0
    %v202 = vlaneseq
    %v203 = vand.u32 %v202, 127
    %vm204 = vcmp.eq.s32.totalorder %v21, %v203
    %vm205 = vcmp.eq.s32.totalorder %v22, %v203
    %vm206 = vcmp.eq.s32.totalorder %v23, %v203
    %v207 = vsub.s32 %v21, %v203
    %v208 = vsub.s32 %v22, %v203
    %v209 = vsub.s32 %v23, %v203
    %vm210 = vcmp.lt.s32.totalorder %v207, 0
    %v211 = vsub.s32 0, %v207
    %v212 = vsel %vm210, %v211, %v207
    %vm213 = vcmp.lt.s32.totalorder %v208, 0
    %v214 = vsub.s32 0, %v208
    %v215 = vsel %vm213, %v214, %v208
    %vm216 = vcmp.lt.s32.totalorder %v209, 0
    %v217 = vsub.s32 0, %v209
    %v218 = vsel %vm216, %v217, %v209
    %vm219 = vcmp.eq.s32.totalorder %v212, 10
    %vm220 = vcmp.eq.s32.totalorder %v215, 10
    %vm221 = vcmp.eq.s32.totalorder %v218, 10
    %v222 = vsel %vm204, -1e+30, %v189
    %v223 = vsel %vm205, -1e+30, %v194
    %v224 = vsel %vm206, -1e+30, %v199
    %vm225 = vcmask 162816
    %v226 = vsel %vm225, %v222, -inf
    %227 = vmax.xlane.f32.xlu0 %v226
    %v228 = vpop.xlane.xlu0 %227
    %v229 = vsel %vm225, %v223, -inf
    %230 = vmax.xlane.f32.xlu0 %v229
    %v231 = vpop.xlane.xlu0 %230
    %vm232 = vcmask 158720
    %v233 = vsel %vm232, %v224, -inf
    %234 = vmax.xlane.f32.xlu0 %v233
    %v235 = vpop.xlane.xlu0 %234
    %v236 = vsub.f32 %v222, %v228
    %v237 = vsub.f32 %v223, %v231
    %v238 = vsub.f32 %v224, %v235
    %v239 = vmul.f32 %v236, 1.442695
    %v240 = vpow.pop %v239
    %v241 = vmul.f32 %v237, 1.442695
    %v242 = vpow.pop %v241
    %v243 = vmul.f32 %v238, 1.442695
    %v244 = vpow.pop %v243
    %v245 = vsel %vm225, %v240, 0.0
    %246 = vadd.xlane.f32.xlu0 %v245
    %v247 = vpop.xlane.xlu0 %246
    %v248 = vsel %vm225, %v242, 0.0
    %249 = vadd.xlane.f32.xlu0 %v248
    %v250 = vpop.xlane.xlu0 %249
    %v251 = vsel %vm232, %v244, 0.0
    %252 = vadd.xlane.f32.xlu0 %v251
    %v253 = vpop.xlane.xlu0 %252
    %v254 = vlog2.pop %v247
    %v255 = vmul.f32 %v254, 0.6931472
    %v256 = vlog2.pop %v250
    %v257 = vmul.f32 %v256, 0.6931472
    %v258 = vlog2.pop %v253
    %v259 = vmul.f32 %v258, 0.6931472
    %v260 = vadd.f32 %v228, %v255
    %v261 = vadd.f32 %v231, %v257
    %v262 = vadd.f32 %v235, %v259
    %v263 = vsel %vm219, %v189, 0.0
    %v264 = vsel %vm220, %v194, 0.0
    %v265 = vsel %vm221, %v199, 0.0
    %v266 = vsel %vm225, %v263, 0.0
    %267 = vadd.xlane.f32.xlu0 %v266
    %v268 = vpop.xlane.xlu0 %267
    %v269 = vsel %vm225, %v264, 0.0
    %270 = vadd.xlane.f32.xlu0 %v269
    %v271 = vpop.xlane.xlu0 %270
    %v272 = vsel %vm232, %v265, 0.0
    %273 = vadd.xlane.f32.xlu0 %v272
    %v274 = vpop.xlane.xlu0 %273
    %v275 = vsub.f32 %v260, %v268
    %v276 = vsub.f32 %v261, %v271
    %v277 = vsub.f32 %v262, %v274
    %v278 = vadd.f32 %v275, %v276
    %v279 = vsel %vm16, %v277, 0.0
    %v280 = vadd.f32 %v278, %v279
    %v281 = vrot.slane %v280, 4
    %v282 = vadd.f32 %v280, %v281
    %v283 = vrot.slane %v282, 2
    %v284 = vadd.f32 %v282, %v283
    %v285 = vrot.slane %v284, 1
    %v286 = vadd.f32 %v284, %v285
    %v287 = vmul.f32 %v286, 0.05
    %v288 = vadd.f32 %v287, %v102
    %vm289 = vcmask 0
    %290 = vst.msk [vmem:[#allocation2] sm:$0x1] %vm289, %v288
    // Predicated region
    $region6: #{cluster_loss.1} parent=1 // pred_check
      _
    $region7: #{cluster_loss.1} parent=1 // pred_check_branch
      %292 = sbr.rel (0) target = $region9
    $region8: #{cluster_loss.1} parent=1 // pred_region
      %s294 = ssub.s32 16, 16
      %295 = vsyncadd [#allocation3], %s294
      %s297 = sshll.u32 [#allocation2], 4
      %s298 = int_to_ptr.vmem [resolvable:$true] %s297
      %300 = dma.vmem_to_hbm [thread:$0]  %s298, 16, %s1, [#allocation3]
    $region9: #{cluster_loss.1} parent=1 // pred_fallthru
      _
    // Predicated region
    $region10: #{cluster_loss.1} parent=1 // pred_check
      _
    $region11: #{cluster_loss.1} parent=1 // pred_check_branch
      %302 = sbr.rel (0) target = $region13
    $region12: #{cluster_loss.1} parent=1 // pred_region
      %303 = dma.done [#allocation3], 16
    $region13: #{cluster_loss.1} parent=1 // pred_fallthru
      _
    %304 = vsyncpa [#allocation3], 1

</llo_original>
